<compile_context>
chip_gen: v7x
topology: tpu7x:2x2x1
jax: 0.10.0
libtpu: 0.0.40
codegen_flags: <defaults>
</compile_context>

<pallas_src>
import functools

import jax
import jax.numpy as jnp
import numpy as np
from jax.experimental import pallas as pl
from jax.experimental.pallas import tpu as pltpu


# ----------------------------------------------------------------------------
# Kernel
# ----------------------------------------------------------------------------
def _disc_kernel(x_ref, xt_ref, w1a_ref, w1b_ref, b1_ref, w2_ref, b2_ref,
                 o_ref, acc_ref):
    # x_ref  : (TB, I)   f32   batch tile of x        (cast to bf16 in-kernel)
    # xt_ref : (TB, I)   f32   batch tile of x_tild
    # w1a_ref: (I, TH)   bf16  W1 rows for x          (resident or hidden-tiled)
    # w1b_ref: (I, TH)   bf16  W1 rows for x_tild
    # b1_ref : (1, TH)   f32
    # w2_ref : (1, TH)   f32   second-layer weight row
    # b2_ref : (1,)      f32   SMEM scalar
    # o_ref  : (1, 1, TB) f32  lane-dense output block
    # acc_ref: (1, 1, TB) f32  VMEM accumulator across hidden tiles
    j = pl.program_id(1)

    @pl.when(j == 0)
    def _init():
        acc_ref[...] = jnp.full(acc_ref.shape, b2_ref[0], acc_ref.dtype)

    xa = x_ref[...].astype(jnp.bfloat16)
    xb = xt_ref[...].astype(jnp.bfloat16)
    # Linear(2I -> 4I) as two K=I MXU contractions accumulating in f32.
    h = jnp.dot(xa, w1a_ref[...], preferred_element_type=jnp.float32)
    h = h + jnp.dot(xb, w1b_ref[...], preferred_element_type=jnp.float32)
    h = jnp.maximum(h + b1_ref[...], 0.0)            # bias + ReLU in f32 (VPU)
    # Dropout(0.5): identity in eval mode.
    # Second linear (out_features == 1) as a lane reduction, not an N=1 matmul.
    p = jnp.sum(h * w2_ref[...], axis=-1)            # (TB,)
    acc_ref[...] += p.reshape(1, 1, -1)

    @pl.when(j == pl.num_programs(1) - 1)
    def _finalize():
        o_ref[...] = acc_ref[...].astype(o_ref.dtype)


# ----------------------------------------------------------------------------
# Tiling / VMEM sizing
# ----------------------------------------------------------------------------
_VMEM_CAPACITY_CACHE = [None]


def _vmem_capacity_bytes():
    """Per-core VMEM capacity (generation-aware); conservative fallback."""
    if _VMEM_CAPACITY_CACHE[0] is None:
        try:
            _VMEM_CAPACITY_CACHE[0] = int(pltpu.get_tpu_info().vmem_capacity_bytes)
        except Exception:
            _VMEM_CAPACITY_CACHE[0] = 64 * 1024 * 1024   # v7x per-TC VMEM
    return _VMEM_CAPACITY_CACHE[0]


def _vmem_bytes_estimate(tb, th, i_dim, weights_single_buffered):
    """Per-grid-step VMEM footprint matching the actual buffering."""
    bf16, f32 = 2, 4
    wbuf = 1 if weights_single_buffered else 2
    x_blocks = 2 * 2 * tb * i_dim * f32           # x & x_tild, double-buffered
    w1_blocks = wbuf * 2 * i_dim * th * bf16      # W1 halves
    vec_blocks = wbuf * 2 * th * f32              # b1 + w2 rows
    out_blocks = 2 * tb * f32                     # (1,1,TB) output, double-buffered
    acc = tb * f32                                # accumulator scratch
    interm = tb * th * f32 + 2 * tb * i_dim * bf16  # f32 h + in-kernel bf16 casts
    return x_blocks + w1_blocks + vec_blocks + out_blocks + acc + interm


def _batch_tile_candidates(b_dim, block_b):
    """Descending batch-tile candidates: full batch, or multiples of 128."""
    cap = max(128, (block_b // 128) * 128)
    if b_dim >= 256:
        # Keep >= 2 batch grid steps so the "parallel" axis can shard the batch
        # over both v7x TensorCores (costs nothing on 1-TC v5e/v6e).
        cap = min(cap, max(128, ((b_dim // 2) // 128) * 128))
    cands = []
    if b_dim <= cap:
        cands.append(b_dim)                       # one block, equal-to-dim is legal
    t = min(cap, (b_dim // 128) * 128)
    while t >= 128:
        if not cands or t < cands[-1]:
            cands.append(t)
        t = (t // 2 // 128) * 128
    if not cands:
        cands.append(b_dim)
    return cands


def _hidden_tile_candidates(h_dim):
    """Full hidden dim, then multiples of 128 that divide it exactly
    (exact divisors so ragged hidden blocks never pollute the reduction)."""
    cands = [h_dim]
    if h_dim % 128 == 0:
        t = h_dim // 2
        while t >= 128:
            if h_dim % t == 0 and t % 128 == 0:
                cands.append(t)
            t //= 2
    return cands


def _choose_tiles(b_dim, i_dim, h_dim, block_b, budget, allow_single_buffer):
    batch_cands = _batch_tile_candidates(b_dim, block_b)
    hidden_cands = _hidden_tile_candidates(h_dim)

    def fits(tb, th, sw):
        return _vmem_bytes_estimate(tb, th, i_dim, sw) <= budget

    # Pass 1: W1 fully resident (DMA'd once, single-buffered when supported)
    # with a reasonably large batch tile.
    for tb in batch_cands:
        if tb < min(256, b_dim):
            break
        if fits(tb, h_dim, allow_single_buffer):
            return tb, h_dim, allow_single_buffer
    # Pass 2: any combination; tile the hidden (4I) axis so W1 / the f32
    # activation never have to fit fully in VMEM (large I on v7x's 64 MiB).
    for tb in batch_cands:
        for th in hidden_cands:
            sw = allow_single_buffer and th == h_dim
            if fits(tb, th, sw):
                return tb, th, sw
    raise ValueError(
        "Discriminator kernel does not fit the VMEM budget "
        f"({budget} bytes): batch={b_dim}, input_size={i_dim}, hidden={h_dim}.")


# ----------------------------------------------------------------------------
# Forward
# ----------------------------------------------------------------------------
@functools.partial(jax.jit, static_argnames=("block_b", "single_buffer_weights"))
def _forward_impl(x, x_tild, params, *, block_b, single_buffer_weights):
    w1a, w1b, b1, w2_row, b2 = params
    b_dim, i_dim = x.shape
    h_dim = w1a.shape[1]

    capacity = _vmem_capacity_bytes()
    budget = (capacity * 3) // 5                    # ~60% of per-core VMEM
    vmem_limit = (capacity * 9) // 10

    tb, th, single_w = _choose_tiles(b_dim, i_dim, h_dim, block_b, budget,
                                     single_buffer_weights)
    g_b = (b_dim + tb - 1) // tb                    # ragged last block is fine
    g_h = h_dim // th                               # th divides h_dim exactly

    def wspec(shape, index_map):
        # Grid-invariant weight blocks -> single-buffered (no wasted VMEM copy).
        if single_w:
            return pl.BlockSpec(shape, index_map, pipeline_mode=pl.Buffered(1))
        return pl.BlockSpec(shape, index_map)

    out = pl.pallas_call(
        _disc_kernel,
        out_shape=jax.ShapeDtypeStruct((g_b, 1, tb), jnp.float32),
        grid=(g_b, g_h),
        in_specs=[
            pl.BlockSpec((tb, i_dim), lambda i, j: (i, 0)),     # x batch tile
            pl.BlockSpec((tb, i_dim), lambda i, j: (i, 0)),     # x_tild batch tile
            wspec((i_dim, th), lambda i, j: (0, j)),            # W1[:I] column block
            wspec((i_dim, th), lambda i, j: (0, j)),            # W1[I:] column block
            wspec((1, th), lambda i, j: (0, j)),                # b1
            wspec((1, th), lambda i, j: (0, j)),                # w2 row
            pl.BlockSpec(memory_space=pltpu.MemorySpace.SMEM),  # b2 scalar
        ],
        out_specs=pl.BlockSpec((1, 1, tb), lambda i, j: (i, 0, 0)),
        scratch_shapes=[pltpu.VMEM((1, 1, tb), jnp.float32)],
        compiler_params=pltpu.CompilerParams(
            dimension_semantics=("parallel", "arbitrary"),
            vmem_limit_bytes=vmem_limit,
        ),
    )(x, x_tild, w1a, w1b, b1, w2_row, b2)

    out = out.reshape(-1)
    if out.shape[0] != b_dim:
        out = out[:b_dim]                           # drop ragged tail rows
    return out


_SINGLE_BUFFER_SUPPORTED = [None]   # None = unknown, True/False once probed


def discriminator_forward(x, x_tild, params, *, block_b=1024):
    """x, x_tild: (B, I) float32 -> (B,) float32 logits."""
    if _SINGLE_BUFFER_SUPPORTED[0] in (None, True):
        try:
            out = _forward_impl(x, x_tild, params, block_b=block_b,
                                single_buffer_weights=True)
            _SINGLE_BUFFER_SUPPORTED[0] = True
            return out
        except Exception:
            if _SINGLE_BUFFER_SUPPORTED[0]:         # known-good -> genuine error
                raise
            _SINGLE_BUFFER_SUPPORTED[0] = False     # Buffered(1) unsupported here
    return _forward_impl(x, x_tild, params, block_b=block_b,
                         single_buffer_weights=False)


# ----------------------------------------------------------------------------
# Params / reference
# ----------------------------------------------------------------------------
def init_params(key, input_size):
    """Xavier-uniform init matching the PyTorch module shapes.

    W1 is stored pre-transposed (in_features, out_features) and pre-split into
    its x / x_tild halves (bf16, MXU-native); W2 is stored as a (1, 4I) row for
    the in-kernel lane reduction.
    """
    in1, out1 = 2 * input_size, 4 * input_size
    in2 = 4 * input_size
    k1, k2, k3, k4 = jax.random.split(key, 4)

    def xavier(k, fan_in, fan_out):
        bound = float(np.sqrt(6.0 / (fan_in + fan_out)))
        return jax.random.uniform(k, (fan_in, fan_out), jnp.float32, -bound, bound)

    w1 = xavier(k1, in1, out1)                       # (2I, 4I)
    w2 = xavier(k2, in2, 1)                          # (4I, 1)
    # PyTorch Linear default bias init: U(-1/sqrt(fan_in), 1/sqrt(fan_in))
    b1 = jax.random.uniform(k3, (1, out1), jnp.float32,
                            -1.0 / float(np.sqrt(in1)), 1.0 / float(np.sqrt(in1)))
    b2 = jax.random.uniform(k4, (1,), jnp.float32,
                            -1.0 / float(np.sqrt(in2)), 1.0 / float(np.sqrt(in2)))
    w1a = w1[:input_size].astype(jnp.bfloat16)       # (I, 4I) bf16
    w1b = w1[input_size:].astype(jnp.bfloat16)       # (I, 4I) bf16
    w2_row = w2.reshape(1, in2)                      # (1, 4I) f32
    return (w1a, w1b, b1, w2_row, b2)


def reference_forward(x, x_tild, params):
    """Pure-JAX reference with the same bf16 quantization as the kernel."""
    w1a, w1b, b1, w2_row, b2 = params
    xa = x.astype(jnp.bfloat16).astype(jnp.float32)
    xb = x_tild.astype(jnp.bfloat16).astype(jnp.float32)
    h = (jnp.dot(xa, w1a.astype(jnp.float32), precision=jax.lax.Precision.HIGHEST)
         + jnp.dot(xb, w1b.astype(jnp.float32), precision=jax.lax.Precision.HIGHEST))
    h = jnp.maximum(h + b1, 0.0)
    return jnp.sum(h * w2_row, axis=-1) + b2[0]


if __name__ == "__main__":
    input_size = 32     # -> concat dim 2I = 64, hidden 4I = 128
    batch = 8

    key = jax.random.PRNGKey(0)
    kx, kxt, kp = jax.random.split(key, 3)
    x = jax.random.normal(kx, (batch, input_size), jnp.float32)
    x_tild = jax.random.normal(kxt, (batch, input_size), jnp.float32)
    params = init_params(kp, input_size)

    out = discriminator_forward(x, x_tild, params)
    out = jax.block_until_ready(out)

    ref = reference_forward(x, x_tild, params)
    assert out.shape == (batch,), out.shape
    np.testing.assert_allclose(np.asarray(out), np.asarray(ref),
                               rtol=1e-3, atol=1e-3)

    print("KERNEL_OK")
</pallas_src>

<mosaic_0001>
module attributes {stable_mosaic.version = 11 : i64} {
  func.func @_disc_kernel(%arg0: i32, %arg1: i32, %arg2: memref<8x32xf32, #tpu.memory_space<vmem>>, %arg3: memref<8x32xf32, #tpu.memory_space<vmem>>, %arg4: memref<32x128xbf16, #tpu.memory_space<vmem>>, %arg5: memref<32x128xbf16, #tpu.memory_space<vmem>>, %arg6: memref<1x128xf32, #tpu.memory_space<vmem>>, %arg7: memref<1x128xf32, #tpu.memory_space<vmem>>, %arg8: memref<1xf32, #tpu.memory_space<smem>>, %arg9: memref<1x1x8xf32, #tpu.memory_space<vmem>>, %arg10: memref<1x1x8xf32, #tpu.memory_space<vmem>>) attributes {dimension_semantics = [#tpu.dimension_semantics<parallel>, #tpu.dimension_semantics<arbitrary>], iteration_bounds = array<i64: 1, 1>, scalar_prefetch = 0 : i64, scratch_operands = 1 : i64, tpu.core_type = #tpu.core_type<tc>, window_params = [{transform_indices = @transform_0, window_bounds = array<i64: 8, 32>}, {transform_indices = @transform_1, window_bounds = array<i64: 8, 32>}, {pipeline_mode = #tpu.pipeline_mode<synchronous>, transform_indices = @transform_2, window_bounds = array<i64: 32, 128>}, {pipeline_mode = #tpu.pipeline_mode<synchronous>, transform_indices = @transform_3, window_bounds = array<i64: 32, 128>}, {pipeline_mode = #tpu.pipeline_mode<synchronous>, transform_indices = @transform_4, window_bounds = array<i64: 1, 128>}, {pipeline_mode = #tpu.pipeline_mode<synchronous>, transform_indices = @transform_5, window_bounds = array<i64: 1, 128>}, {transform_indices = @transform_6, window_bounds = array<i64: 1>}, {transform_indices = @transform_7, window_bounds = array<i64: 1, 1, 8>}]} {
    %c0_i32 = arith.constant 0 : i32
    %0 = arith.cmpi eq, %arg1, %c0_i32 : i32
    %1 = arith.extui %0 : i1 to i32
    %c0_i32_0 = arith.constant 0 : i32
    %2 = arith.cmpi ne, %1, %c0_i32_0 : i32
    scf.if %2 {
      %c0_23 = arith.constant 0 : index
      %28 = memref.load %arg8[%c0_23] : memref<1xf32, #tpu.memory_space<smem>>
      %29 = vector.broadcast %28 : f32 to vector<1x1x8xf32>
      %c0_24 = arith.constant 0 : index
      %c0_25 = arith.constant 0 : index
      %c0_26 = arith.constant 0 : index
      %30 = vector.load %arg10[%c0_24, %c0_25, %c0_26] : memref<1x1x8xf32, #tpu.memory_space<vmem>>, vector<1x1x8xf32>
      tpu.vector_store %arg10[%c0_24, %c0_25, %c0_26], %29 {strides = array<i32>} : memref<1x1x8xf32, #tpu.memory_space<vmem>>, vector<1x1x8xf32>,
    } else {
    }
    %c0 = arith.constant 0 : index
    %c0_1 = arith.constant 0 : index
    %3 = vector.load %arg2[%c0, %c0_1] : memref<8x32xf32, #tpu.memory_space<vmem>>, vector<8x32xf32>
    %4 = arith.truncf %3 : vector<8x32xf32> to vector<8x32xbf16>
    %c0_2 = arith.constant 0 : index
    %c0_3 = arith.constant 0 : index
    %5 = vector.load %arg3[%c0_2, %c0_3] : memref<8x32xf32, #tpu.memory_space<vmem>>, vector<8x32xf32>
    %6 = arith.truncf %5 : vector<8x32xf32> to vector<8x32xbf16>
    %c0_4 = arith.constant 0 : index
    %c0_5 = arith.constant 0 : index
    %7 = vector.load %arg4[%c0_4, %c0_5] : memref<32x128xbf16, #tpu.memory_space<vmem>>, vector<32x128xbf16>
    %cst = arith.constant dense<0.000000e+00> : vector<8x128xf32>
    %8 = tpu.matmul %4, %7, %cst {dimension_numbers = #tpu.dot_dimension_numbers<[1], [0], [0], [1], [0, 0, 1, 1], [], []>} : vector<8x32xbf16>, vector<32x128xbf16>, vector<8x128xf32> -> vector<8x128xf32>
    %c0_6 = arith.constant 0 : index
    %c0_7 = arith.constant 0 : index
    %9 = vector.load %arg5[%c0_6, %c0_7] : memref<32x128xbf16, #tpu.memory_space<vmem>>, vector<32x128xbf16>
    %cst_8 = arith.constant dense<0.000000e+00> : vector<8x128xf32>
    %10 = tpu.matmul %6, %9, %cst_8 {dimension_numbers = #tpu.dot_dimension_numbers<[1], [0], [0], [1], [0, 0, 1, 1], [], []>} : vector<8x32xbf16>, vector<32x128xbf16>, vector<8x128xf32> -> vector<8x128xf32>
    %11 = arith.addf %8, %10 : vector<8x128xf32>
    %c0_9 = arith.constant 0 : index
    %c0_10 = arith.constant 0 : index
    %12 = vector.load %arg6[%c0_9, %c0_10] : memref<1x128xf32, #tpu.memory_space<vmem>>, vector<1x128xf32>
    %13 = vector.broadcast %12 : vector<1x128xf32> to vector<8x128xf32>
    %14 = arith.addf %11, %13 : vector<8x128xf32>
    %cst_11 = arith.constant 0.000000e+00 : f32
    %15 = vector.broadcast %cst_11 : f32 to vector<8x128xf32>
    %16 = arith.maximumf %14, %15 : vector<8x128xf32>
    %c0_12 = arith.constant 0 : index
    %c0_13 = arith.constant 0 : index
    %17 = vector.load %arg7[%c0_12, %c0_13] : memref<1x128xf32, #tpu.memory_space<vmem>>, vector<1x128xf32>
    %18 = vector.broadcast %17 : vector<1x128xf32> to vector<8x128xf32>
    %19 = arith.mulf %16, %18 : vector<8x128xf32>
    %cst_14 = arith.constant dense<0.000000e+00> : vector<8xf32>
    %20 = vector.multi_reduction <add>, %19, %cst_14 [1] : vector<8x128xf32> to vector<8xf32>
    %c0_15 = arith.constant 0 : index
    %c0_16 = arith.constant 0 : index
    %c0_17 = arith.constant 0 : index
    %21 = vector.load %arg10[%c0_15, %c0_16, %c0_17] : memref<1x1x8xf32, #tpu.memory_space<vmem>>, vector<1x1x8xf32>
    %22 = vector.shape_cast %20 : vector<8xf32> to vector<1x1x8xf32>
    %23 = arith.addf %21, %22 : vector<1x1x8xf32>
    %c0_18 = arith.constant 0 : index
    %c0_19 = arith.constant 0 : index
    %c0_20 = arith.constant 0 : index
    %24 = vector.load %arg10[%c0_18, %c0_19, %c0_20] : memref<1x1x8xf32, #tpu.memory_space<vmem>>, vector<1x1x8xf32>
    tpu.vector_store %arg10[%c0_18, %c0_19, %c0_20], %23 {strides = array<i32>} : memref<1x1x8xf32, #tpu.memory_space<vmem>>, vector<1x1x8xf32>,
    %c0_i32_21 = arith.constant 0 : i32
    %25 = arith.cmpi eq, %arg1, %c0_i32_21 : i32
    %26 = arith.extui %25 : i1 to i32
    %c0_i32_22 = arith.constant 0 : i32
    %27 = arith.cmpi ne, %26, %c0_i32_22 : i32
    scf.if %27 {
      %c0_23 = arith.constant 0 : index
      %c0_24 = arith.constant 0 : index
      %c0_25 = arith.constant 0 : index
      %28 = vector.load %arg10[%c0_23, %c0_24, %c0_25] : memref<1x1x8xf32, #tpu.memory_space<vmem>>, vector<1x1x8xf32>
      %c0_26 = arith.constant 0 : index
      %c0_27 = arith.constant 0 : index
      %c0_28 = arith.constant 0 : index
      %29 = vector.load %arg9[%c0_26, %c0_27, %c0_28] : memref<1x1x8xf32, #tpu.memory_space<vmem>>, vector<1x1x8xf32>
      tpu.vector_store %arg9[%c0_26, %c0_27, %c0_28], %28 {strides = array<i32>} : memref<1x1x8xf32, #tpu.memory_space<vmem>>, vector<1x1x8xf32>,
    } else {
    }
    return
  }
  func.func @transform_0(%arg0: i32, %arg1: i32) -> (i32, i32) {
    %c0_i32 = arith.constant 0 : i32
    %c0_i32_0 = arith.constant 0 : i32
    return %arg0, %c0_i32 : i32, i32
  }
  func.func @transform_1(%arg0: i32, %arg1: i32) -> (i32, i32) {
    %c0_i32 = arith.constant 0 : i32
    %c0_i32_0 = arith.constant 0 : i32
    return %arg0, %c0_i32 : i32, i32
  }
  func.func @transform_2(%arg0: i32, %arg1: i32) -> (i32, i32) {
    %c0_i32 = arith.constant 0 : i32
    %c0_i32_0 = arith.constant 0 : i32
    return %c0_i32, %arg1 : i32, i32
  }
  func.func @transform_3(%arg0: i32, %arg1: i32) -> (i32, i32) {
    %c0_i32 = arith.constant 0 : i32
    %c0_i32_0 = arith.constant 0 : i32
    return %c0_i32, %arg1 : i32, i32
  }
  func.func @transform_4(%arg0: i32, %arg1: i32) -> (i32, i32) {
    %c0_i32 = arith.constant 0 : i32
    %c0_i32_0 = arith.constant 0 : i32
    return %c0_i32, %arg1 : i32, i32
  }
  func.func @transform_5(%arg0: i32, %arg1: i32) -> (i32, i32) {
    %c0_i32 = arith.constant 0 : i32
    %c0_i32_0 = arith.constant 0 : i32
    return %c0_i32, %arg1 : i32, i32
  }
  func.func @transform_6(%arg0: i32, %arg1: i32) -> i32 {
    %c0_i32 = arith.constant 0 : i32
    %c0_i32_0 = arith.constant 0 : i32
    return %c0_i32 : i32
  }
  func.func @transform_7(%arg0: i32, %arg1: i32) -> (i32, i32, i32) {
    %c0_i32 = arith.constant 0 : i32
    %c0_i32_0 = arith.constant 0 : i32
    %c0_i32_1 = arith.constant 0 : i32
    return %arg0, %c0_i32, %c0_i32_0 : i32, i32, i32
  }
}

module attributes {stable_mosaic.version = 11 : i64} {
  func.func @_disc_kernel(%arg0: i32, %arg1: i32, %arg2: memref<8x32xf32, #tpu.memory_space<vmem>>, %arg3: memref<8x32xf32, #tpu.memory_space<vmem>>, %arg4: memref<32x128xbf16, #tpu.memory_space<vmem>>, %arg5: memref<32x128xbf16, #tpu.memory_space<vmem>>, %arg6: memref<1x128xf32, #tpu.memory_space<vmem>>, %arg7: memref<1x128xf32, #tpu.memory_space<vmem>>, %arg8: memref<1xf32, #tpu.memory_space<smem>>, %arg9: memref<1x1x8xf32, #tpu.memory_space<vmem>>, %arg10: memref<1x1x8xf32, #tpu.memory_space<vmem>>) attributes {dimension_semantics = [#tpu.dimension_semantics<parallel>, #tpu.dimension_semantics<arbitrary>], iteration_bounds = array<i64: 1, 1>, scalar_prefetch = 0 : i64, scratch_operands = 1 : i64, tpu.core_type = #tpu.core_type<tc>, window_params = [{transform_indices = @transform_0, window_bounds = array<i64: 8, 32>}, {transform_indices = @transform_1, window_bounds = array<i64: 8, 32>}, {transform_indices = @transform_2, window_bounds = array<i64: 32, 128>}, {transform_indices = @transform_3, window_bounds = array<i64: 32, 128>}, {transform_indices = @transform_4, window_bounds = array<i64: 1, 128>}, {transform_indices = @transform_5, window_bounds = array<i64: 1, 128>}, {transform_indices = @transform_6, window_bounds = array<i64: 1>}, {transform_indices = @transform_7, window_bounds = array<i64: 1, 1, 8>}]} {
    %c0_i32 = arith.constant 0 : i32
    %0 = arith.cmpi eq, %arg1, %c0_i32 : i32
    %1 = arith.extui %0 : i1 to i32
    %c0_i32_0 = arith.constant 0 : i32
    %2 = arith.cmpi ne, %1, %c0_i32_0 : i32
    scf.if %2 {
      %c0_23 = arith.constant 0 : index
      %28 = memref.load %arg8[%c0_23] : memref<1xf32, #tpu.memory_space<smem>>
      %29 = vector.broadcast %28 : f32 to vector<1x1x8xf32>
      %c0_24 = arith.constant 0 : index
      %c0_25 = arith.constant 0 : index
      %c0_26 = arith.constant 0 : index
      %30 = vector.load %arg10[%c0_24, %c0_25, %c0_26] : memref<1x1x8xf32, #tpu.memory_space<vmem>>, vector<1x1x8xf32>
      tpu.vector_store %arg10[%c0_24, %c0_25, %c0_26], %29 {strides = array<i32>} : memref<1x1x8xf32, #tpu.memory_space<vmem>>, vector<1x1x8xf32>,
    } else {
    }
    %c0 = arith.constant 0 : index
    %c0_1 = arith.constant 0 : index
    %3 = vector.load %arg2[%c0, %c0_1] : memref<8x32xf32, #tpu.memory_space<vmem>>, vector<8x32xf32>
    %4 = arith.truncf %3 : vector<8x32xf32> to vector<8x32xbf16>
    %c0_2 = arith.constant 0 : index
    %c0_3 = arith.constant 0 : index
    %5 = vector.load %arg3[%c0_2, %c0_3] : memref<8x32xf32, #tpu.memory_space<vmem>>, vector<8x32xf32>
    %6 = arith.truncf %5 : vector<8x32xf32> to vector<8x32xbf16>
    %c0_4 = arith.constant 0 : index
    %c0_5 = arith.constant 0 : index
    %7 = vector.load %arg4[%c0_4, %c0_5] : memref<32x128xbf16, #tpu.memory_space<vmem>>, vector<32x128xbf16>
    %cst = arith.constant dense<0.000000e+00> : vector<8x128xf32>
    %8 = tpu.matmul %4, %7, %cst {dimension_numbers = #tpu.dot_dimension_numbers<[1], [0], [0], [1], [0, 0, 1, 1], [], []>} : vector<8x32xbf16>, vector<32x128xbf16>, vector<8x128xf32> -> vector<8x128xf32>
    %c0_6 = arith.constant 0 : index
    %c0_7 = arith.constant 0 : index
    %9 = vector.load %arg5[%c0_6, %c0_7] : memref<32x128xbf16, #tpu.memory_space<vmem>>, vector<32x128xbf16>
    %cst_8 = arith.constant dense<0.000000e+00> : vector<8x128xf32>
    %10 = tpu.matmul %6, %9, %cst_8 {dimension_numbers = #tpu.dot_dimension_numbers<[1], [0], [0], [1], [0, 0, 1, 1], [], []>} : vector<8x32xbf16>, vector<32x128xbf16>, vector<8x128xf32> -> vector<8x128xf32>
    %11 = arith.addf %8, %10 : vector<8x128xf32>
    %c0_9 = arith.constant 0 : index
    %c0_10 = arith.constant 0 : index
    %12 = vector.load %arg6[%c0_9, %c0_10] : memref<1x128xf32, #tpu.memory_space<vmem>>, vector<1x128xf32>
    %13 = vector.broadcast %12 : vector<1x128xf32> to vector<8x128xf32>
    %14 = arith.addf %11, %13 : vector<8x128xf32>
    %cst_11 = arith.constant 0.000000e+00 : f32
    %15 = vector.broadcast %cst_11 : f32 to vector<8x128xf32>
    %16 = arith.maximumf %14, %15 : vector<8x128xf32>
    %c0_12 = arith.constant 0 : index
    %c0_13 = arith.constant 0 : index
    %17 = vector.load %arg7[%c0_12, %c0_13] : memref<1x128xf32, #tpu.memory_space<vmem>>, vector<1x128xf32>
    %18 = vector.broadcast %17 : vector<1x128xf32> to vector<8x128xf32>
    %19 = arith.mulf %16, %18 : vector<8x128xf32>
    %cst_14 = arith.constant dense<0.000000e+00> : vector<8xf32>
    %20 = vector.multi_reduction <add>, %19, %cst_14 [1] : vector<8x128xf32> to vector<8xf32>
    %c0_15 = arith.constant 0 : index
    %c0_16 = arith.constant 0 : index
    %c0_17 = arith.constant 0 : index
    %21 = vector.load %arg10[%c0_15, %c0_16, %c0_17] : memref<1x1x8xf32, #tpu.memory_space<vmem>>, vector<1x1x8xf32>
    %22 = vector.shape_cast %20 : vector<8xf32> to vector<1x1x8xf32>
    %23 = arith.addf %21, %22 : vector<1x1x8xf32>
    %c0_18 = arith.constant 0 : index
    %c0_19 = arith.constant 0 : index
    %c0_20 = arith.constant 0 : index
    %24 = vector.load %arg10[%c0_18, %c0_19, %c0_20] : memref<1x1x8xf32, #tpu.memory_space<vmem>>, vector<1x1x8xf32>
    tpu.vector_store %arg10[%c0_18, %c0_19, %c0_20], %23 {strides = array<i32>} : memref<1x1x8xf32, #tpu.memory_space<vmem>>, vector<1x1x8xf32>,
    %c0_i32_21 = arith.constant 0 : i32
    %25 = arith.cmpi eq, %arg1, %c0_i32_21 : i32
    %26 = arith.extui %25 : i1 to i32
    %c0_i32_22 = arith.constant 0 : i32
    %27 = arith.cmpi ne, %26, %c0_i32_22 : i32
    scf.if %27 {
      %c0_23 = arith.constant 0 : index
      %c0_24 = arith.constant 0 : index
      %c0_25 = arith.constant 0 : index
      %28 = vector.load %arg10[%c0_23, %c0_24, %c0_25] : memref<1x1x8xf32, #tpu.memory_space<vmem>>, vector<1x1x8xf32>
      %c0_26 = arith.constant 0 : index
      %c0_27 = arith.constant 0 : index
      %c0_28 = arith.constant 0 : index
      %29 = vector.load %arg9[%c0_26, %c0_27, %c0_28] : memref<1x1x8xf32, #tpu.memory_space<vmem>>, vector<1x1x8xf32>
      tpu.vector_store %arg9[%c0_26, %c0_27, %c0_28], %28 {strides = array<i32>} : memref<1x1x8xf32, #tpu.memory_space<vmem>>, vector<1x1x8xf32>,
    } else {
    }
    return
  }
  func.func @transform_0(%arg0: i32, %arg1: i32) -> (i32, i32) {
    %c0_i32 = arith.constant 0 : i32
    %c0_i32_0 = arith.constant 0 : i32
    return %arg0, %c0_i32 : i32, i32
  }
  func.func @transform_1(%arg0: i32, %arg1: i32) -> (i32, i32) {
    %c0_i32 = arith.constant 0 : i32
    %c0_i32_0 = arith.constant 0 : i32
    return %arg0, %c0_i32 : i32, i32
  }
  func.func @transform_2(%arg0: i32, %arg1: i32) -> (i32, i32) {
    %c0_i32 = arith.constant 0 : i32
    %c0_i32_0 = arith.constant 0 : i32
    return %c0_i32, %arg1 : i32, i32
  }
  func.func @transform_3(%arg0: i32, %arg1: i32) -> (i32, i32) {
    %c0_i32 = arith.constant 0 : i32
    %c0_i32_0 = arith.constant 0 : i32
    return %c0_i32, %arg1 : i32, i32
  }
  func.func @transform_4(%arg0: i32, %arg1: i32) -> (i32, i32) {
    %c0_i32 = arith.constant 0 : i32
    %c0_i32_0 = arith.constant 0 : i32
    return %c0_i32, %arg1 : i32, i32
  }
  func.func @transform_5(%arg0: i32, %arg1: i32) -> (i32, i32) {
    %c0_i32 = arith.constant 0 : i32
    %c0_i32_0 = arith.constant 0 : i32
    return %c0_i32, %arg1 : i32, i32
  }
  func.func @transform_6(%arg0: i32, %arg1: i32) -> i32 {
    %c0_i32 = arith.constant 0 : i32
    %c0_i32_0 = arith.constant 0 : i32
    return %c0_i32 : i32
  }
  func.func @transform_7(%arg0: i32, %arg1: i32) -> (i32, i32, i32) {
    %c0_i32 = arith.constant 0 : i32
    %c0_i32_0 = arith.constant 0 : i32
    %c0_i32_1 = arith.constant 0 : i32
    return %arg0, %c0_i32, %c0_i32_0 : i32, i32, i32
  }
}

</mosaic_0001>

<llo_original>
// kernel: _forward_impl.1
$region0: #{_forward_impl.1}
  #allocation0 [shape = 'u32[]', space=smem, size = 0x4, offset = 0x4, fixed_abs, tag = 'smem constant byte address 0x4 - core index']
  #allocation1 [shape = 'u32[144,128]{1,0:T(1,128)}', space=vmem, size = 0x12000, scoped, tag = 'internal scratch']
  #allocation2 [shape = 'f32[1,1,8]{2,1,0:T(1,128)}', space=vmem, size = 0x200, scoped, tag = 'scratch operand']
  #allocation3 [shape = 'f32[1]{0:T(128)S(6)}', space=smem, size = 0x200, scoped, tag = 'scoped memory for _forward_impl.1']
  %s0 = inlined_call_operand.hbm [shape: f32[8,32], index: 0, kind: input, shape index: {}]
  %s1 = inlined_call_operand.hbm [shape: f32[8,32], index: 1, kind: input, shape index: {}]
  %s2 = inlined_call_operand.hbm [shape: bf16[32,128], index: 2, kind: input, shape index: {}]
  %s3 = inlined_call_operand.hbm [shape: bf16[32,128], index: 3, kind: input, shape index: {}]
  %s4 = inlined_call_operand.vmem [shape: f32[1,128], index: 4, kind: input, shape index: {}]
  %s5 = inlined_call_operand.vmem [shape: f32[1,128], index: 5, kind: input, shape index: {}]
  %s6 = inlined_call_operand.<no memory space> [shape: f32[1], index: 6, kind: input, shape index: {}]
  %s7 = inlined_call_operand.hbm [shape: f32[1,1,8], index: 7, kind: output, shape index: {}]
  %s8 = sld [smem:[#allocation0]]
  $region62: #{_forward_impl.1} parent=0
    _
  %s10 = ssub.s32 1, %s8
  %s11 = scalar_select 0, %s10, %s8
  %12 = sst [smem:[#allocation3]] %s6
  $region1: #{_forward_impl.1} parent=0
    #allocation4 [shape = 'u8[4096]{0}', space=vmem, size = 0x1000, scoped, tag = 'input window, operand 0, single buffered']
    #allocation5 [shape = 's32[1]{0}', space=sflag, size = 0x4, scoped, tag = 'scoped memory for _forward_impl.1']
    #allocation6 [shape = 's32[1]{0}', space=sflag, size = 0x4, scoped, tag = 'scoped memory for _forward_impl.1']
    #allocation7 [shape = 'u8[4096]{0}', space=vmem, size = 0x1000, scoped, tag = 'input window, operand 1, single buffered']
    #allocation8 [shape = 's32[1]{0}', space=sflag, size = 0x4, scoped, tag = 'scoped memory for _forward_impl.1']
    #allocation9 [shape = 'u8[8192]{0}', space=vmem, size = 0x2000, scoped, tag = 'input window, operand 2, single buffered']
    #allocation10 [shape = 'u8[8192]{0}', space=vmem, size = 0x2000, scoped, tag = 'input window, operand 3, single buffered']
    #allocation11 [shape = 's32[1]{0}', space=sflag, size = 0x4, scoped, tag = 'scoped memory for _forward_impl.1']
    #allocation12 [shape = 'u8[512]{0}', space=vmem, size = 0x400, scoped, tag = 'output window, operand 0, single buffered']
    %13 = vsyncpa [#allocation5], 0
    %14 = vsyncpa [#allocation8], 0
    %15 = vsyncpa [#allocation11], 0
    %16 = vsyncpa [#allocation6], 0
    // Predicated region
    $region2: #{_forward_impl.1} parent=1 // pred_check
      _
    $region3: #{_forward_impl.1} parent=1 // pred_check_branch
      %18 = sbr.rel (0) target = $region5
    $region4: #{_forward_impl.1} parent=1 // pred_region
      %s20 = ssub.s32 128, 128
      %21 = vsyncadd [#allocation5], %s20
      %s23 = sshll.u32 [#allocation4], 4
      %s24 = int_to_ptr.vmem [resolvable:$true] %s23
      %26 = dma.hbm_to_vmem [thread:$0]  %s0, 128, %s24, [#allocation5]
    $region5: #{_forward_impl.1} parent=1 // pred_fallthru
      _
    // Predicated region
    $region6: #{_forward_impl.1} parent=1 // pred_check
      _
    $region7: #{_forward_impl.1} parent=1 // pred_check_branch
      %28 = sbr.rel (0) target = $region9
    $region8: #{_forward_impl.1} parent=1 // pred_region
      %s30 = ssub.s32 128, 128
      %31 = vsyncadd [#allocation8], %s30
      %s33 = sshll.u32 [#allocation7], 4
      %s34 = int_to_ptr.vmem [resolvable:$true] %s33
      %36 = dma.hbm_to_vmem [thread:$0]  %s1, 128, %s34, [#allocation8]
    $region9: #{_forward_impl.1} parent=1 // pred_fallthru
      _
    // Predicated region
    $region10: #{_forward_impl.1} parent=1 // pred_check
      _
    $region11: #{_forward_impl.1} parent=1 // pred_check_branch
      %38 = sbr.rel (0) target = $region13
    $region12: #{_forward_impl.1} parent=1 // pred_region
      %s40 = ssub.s32 256, 256
      %41 = vsyncadd [#allocation8], %s40
      %s42 = sshll.u32 [#allocation9], 4
      %s43 = int_to_ptr.vmem [resolvable:$true] %s42
      %48 = dma.hbm_to_vmem [thread:$0]  %s2, 256, %s43, [#allocation8], 64, 64, 4
    $region13: #{_forward_impl.1} parent=1 // pred_fallthru
      _
    // Predicated region
    $region14: #{_forward_impl.1} parent=1 // pred_check
      _
    $region15: #{_forward_impl.1} parent=1 // pred_check_branch
      %50 = sbr.rel (0) target = $region17
    $region16: #{_forward_impl.1} parent=1 // pred_region
      %s52 = ssub.s32 256, 256
      %53 = vsyncadd [#allocation11], %s52
      %s54 = sshll.u32 [#allocation10], 4
      %s55 = int_to_ptr.vmem [resolvable:$true] %s54
      %60 = dma.hbm_to_vmem [thread:$0]  %s3, 256, %s55, [#allocation11], 64, 64, 4
    $region17: #{_forward_impl.1} parent=1 // pred_fallthru
      _
    // Predicated region
    $region18: #{_forward_impl.1} parent=1 // pred_check
      _
    $region19: #{_forward_impl.1} parent=1 // pred_check_branch
      %62 = sbr.rel (0) target = $region21
    $region20: #{_forward_impl.1} parent=1 // pred_region
      _
    $region21: #{_forward_impl.1} parent=1 // pred_fallthru
      _
    // Predicated region
    $region22: #{_forward_impl.1} parent=1 // pred_check
      _
    $region23: #{_forward_impl.1} parent=1 // pred_check_branch
      %64 = sbr.rel (0) target = $region25
    $region24: #{_forward_impl.1} parent=1 // pred_region
      _
    $region25: #{_forward_impl.1} parent=1 // pred_fallthru
      _
    // Predicated region
    $region26: #{_forward_impl.1} parent=1 // pred_check
      _
    $region27: #{_forward_impl.1} parent=1 // pred_check_branch
      %66 = sbr.rel (0) target = $region29
    $region28: #{_forward_impl.1} parent=1 // pred_region
      _
    $region29: #{_forward_impl.1} parent=1 // pred_fallthru
      _
    // Predicated region
    $region30: #{_forward_impl.1} parent=1 // pred_check
      _
    $region31: #{_forward_impl.1} parent=1 // pred_check_branch
      %68 = sbr.rel (0) target = $region33
    $region32: #{_forward_impl.1} parent=1 // pred_region
      %69 = dma.done [#allocation5], 128
    $region33: #{_forward_impl.1} parent=1 // pred_fallthru
      _
    // Predicated region
    $region34: #{_forward_impl.1} parent=1 // pred_check
      _
    $region35: #{_forward_impl.1} parent=1 // pred_check_branch
      %71 = sbr.rel (0) target = $region37
    $region36: #{_forward_impl.1} parent=1 // pred_region
      %72 = dma.done [#allocation8], 128
    $region37: #{_forward_impl.1} parent=1 // pred_fallthru
      _
    // Predicated region
    $region38: #{_forward_impl.1} parent=1 // pred_check
      _
    $region39: #{_forward_impl.1} parent=1 // pred_check_branch
      %74 = sbr.rel (0) target = $region41
    $region40: #{_forward_impl.1} parent=1 // pred_region
      %75 = dma.done [#allocation8], 256
    $region41: #{_forward_impl.1} parent=1 // pred_fallthru
      _
    // Predicated region
    $region42: #{_forward_impl.1} parent=1 // pred_check
      _
    $region43: #{_forward_impl.1} parent=1 // pred_check_branch
      %77 = sbr.rel (0) target = $region45
    $region44: #{_forward_impl.1} parent=1 // pred_region
      %78 = dma.done [#allocation11], 256
    $region45: #{_forward_impl.1} parent=1 // pred_fallthru
      _
    %p80 = scmp.eq.s32.totalorder 0, 0
    // Predicated region
    $region46: #{_forward_impl.1} parent=1 // pred_check
      %p81 = pneg %p80
    $region47: #{_forward_impl.1} parent=1 // pred_check_branch
      %83 = sbr.rel (%p81) target = $region49
    $region48: #{_forward_impl.1} parent=1 // pred_region
      %s84 = sld [smem:[#allocation3]]
      %v85 = vstv %s84
      %vm86 = vcmask 57344
      %87 = vst.msk [vmem:[#allocation2] sm:$0x1] %vm86, %v85
    $region49: #{_forward_impl.1} parent=1 // pred_fallthru
      _
    %v88 = vld [vmem:[#allocation4] sm:$0xff]
    %v89 = vpack.c.bf16 %v88, %v88
    %v90 = vld [vmem:[#allocation7] sm:$0xff]
    %v91 = vpack.c.bf16 %v90, %v90
    %v92 = vld [vmem:[#allocation9] sm:$0xf]
    %v93 = vld [vmem:[#allocation9 + $0x4] sm:$0xf]
    %v94 = vld [vmem:[#allocation9 + $0x8] sm:$0xf]
    %v95 = vld [vmem:[#allocation9 + $0xc] sm:$0xf]
    %v96 = vld [vmem:[#allocation10] sm:$0xf]
    %v97 = vld [vmem:[#allocation10 + $0x4] sm:$0xf]
    %v98 = vld [vmem:[#allocation10 + $0x8] sm:$0xf]
    %v99 = vld [vmem:[#allocation10 + $0xc] sm:$0xf]
    %v104 = vunpack.c.l.b16 %v96
    %v105 = vunpack.c.l.b16 %v97
    %v106 = vunpack.c.l.b16 %v98
    %v107 = vunpack.c.l.b16 %v99
    %v108 = vpack.c.b16 %v105, %v104
    %v109 = vpack.c.b16 %v107, %v106
    %vm112 = vcmask 261120
    %v114 = vsel %vm112, %v91, 0
    %116 = vmatprep.subr.bf16.mxu0 0
    %117 = vmatpush1.bf16.msra.mxu0 %v108
    %118 = vmatprep.subr.bf16.mxu0 0
    %119 = vmatpush1.bf16.msra.mxu0 %v109
    %120 = vmatprep.subr.bf16.mxu0 0
    %121 = vmatpush1.bf16.msra.mxu0 0
    %122 = vmatprep.subr.bf16.mxu0 0
    %123 = vmatpush1.bf16.msra.mxu0 0
    %124 = vmatprep.subr.bf16.mxu0 0
    %125 = vmatpush1.bf16.msra.mxu0 0
    %126 = vmatprep.subr.bf16.mxu0 0
    %127 = vmatpush1.bf16.msra.mxu0 0
    %128 = vmatprep.subr.bf16.mxu0 0
    %129 = vmatpush1.bf16.msra.mxu0 0
    %130 = vmatprep.subr.bf16.mxu0 0
    %131 = vmatpush1.bf16.msra.mxu0 0
    %132 = vmatprep.subr.bf16.mxu0 0
    %133 = vmatpush1.bf16.msra.mxu0 0
    %134 = vmatprep.subr.bf16.mxu0 0
    %135 = vmatpush1.bf16.msra.mxu0 0
    %136 = vmatprep.subr.bf16.mxu0 0
    %137 = vmatpush1.bf16.msra.mxu0 0
    %138 = vmatprep.subr.bf16.mxu0 0
    %139 = vmatpush1.bf16.msra.mxu0 0
    %140 = vmatprep.subr.bf16.mxu0 0
    %141 = vmatpush1.bf16.msra.mxu0 0
    %142 = vmatprep.subr.bf16.mxu0 0
    %143 = vmatpush1.bf16.msra.mxu0 0
    %144 = vmatprep.subr.bf16.mxu0 0
    %145 = vmatpush1.bf16.msra.mxu0 0
    %146 = vmatprep.subr.bf16.mxu0 0
    %147 = vmatpush1.bf16.msra.mxu0 0
    %148 = vmatprep.mubr.bf16.mxu0 0
    %149 = vmatmul.mubr.bf16.gmra.mrb[0].mxu0 %v114
    %v150 = vpop.f32.mrb[0].mxu0
    %v151 = vadd.f32 0.0, %v150
    %v152 = vpop.f32.mrb[0].mxu0
    %v153 = vpop.f32.mrb[0].mxu0
    %v154 = vpop.f32.mrb[0].mxu0
    %155 = vdwg.mxu0
    %v160 = vunpack.c.l.b16 %v92
    %v161 = vunpack.c.l.b16 %v93
    %v162 = vunpack.c.l.b16 %v94
    %v163 = vunpack.c.l.b16 %v95
    %v164 = vpack.c.b16 %v161, %v160
    %v165 = vpack.c.b16 %v163, %v162
    %v169 = vsel %vm112, %v89, 0
    %171 = vmatprep.subr.bf16.mxu0 0
    %172 = vmatpush1.bf16.msra.mxu0 %v164
    %173 = vmatprep.subr.bf16.mxu0 0
    %174 = vmatpush1.bf16.msra.mxu0 %v165
    %175 = vmatprep.subr.bf16.mxu0 0
    %176 = vmatpush1.bf16.msra.mxu0 0
    %177 = vmatprep.subr.bf16.mxu0 0
    %178 = vmatpush1.bf16.msra.mxu0 0
    %179 = vmatprep.subr.bf16.mxu0 0
    %180 = vmatpush1.bf16.msra.mxu0 0
    %181 = vmatprep.subr.bf16.mxu0 0
    %182 = vmatpush1.bf16.msra.mxu0 0
    %183 = vmatprep.subr.bf16.mxu0 0
    %184 = vmatpush1.bf16.msra.mxu0 0
    %185 = vmatprep.subr.bf16.mxu0 0
    %186 = vmatpush1.bf16.msra.mxu0 0
    %187 = vmatprep.subr.bf16.mxu0 0
    %188 = vmatpush1.bf16.msra.mxu0 0
    %189 = vmatprep.subr.bf16.mxu0 0
    %190 = vmatpush1.bf16.msra.mxu0 0
    %191 = vmatprep.subr.bf16.mxu0 0
    %192 = vmatpush1.bf16.msra.mxu0 0
    %193 = vmatprep.subr.bf16.mxu0 0
    %194 = vmatpush1.bf16.msra.mxu0 0
    %195 = vmatprep.subr.bf16.mxu0 0
    %196 = vmatpush1.bf16.msra.mxu0 0
    %197 = vmatprep.subr.bf16.mxu0 0
    %198 = vmatpush1.bf16.msra.mxu0 0
    %199 = vmatprep.subr.bf16.mxu0 0
    %200 = vmatpush1.bf16.msra.mxu0 0
    %201 = vmatprep.subr.bf16.mxu0 0
    %202 = vmatpush1.bf16.msra.mxu0 0
    %203 = vmatprep.mubr.bf16.mxu0 0
    %204 = vmatmul.mubr.bf16.gmra.mrb[0].mxu0 %v169
    %v205 = vpop.f32.mrb[0].mxu0
    %v206 = vadd.f32 %v151, %v205
    %v207 = vpop.f32.mrb[0].mxu0
    %v208 = vpop.f32.mrb[0].mxu0
    %v209 = vpop.f32.mrb[0].mxu0
    %210 = vdwg.mxu0
    %v211 = vld [vmem:[%s4] sm:$0x1]
    %v213 = vlaneseq
    %v214 = vshrl.u32 %v213, 7
    %v215 = vsub.s32 0, %v214
    %v216 = vrot.slane %v211, %v215
    %v218 = vadd.f32 %v206, %v216
    %v219 = vmax.f32 %v218, 0.0
    %v220 = vld [vmem:[%s5] sm:$0x1]
    %v222 = vlaneseq
    %v223 = vshrl.u32 %v222, 7
    %v224 = vsub.s32 0, %v223
    %v225 = vrot.slane %v220, %v224
    %v227 = vmul.f32 %v219, %v225
    %228 = vadd.xlane.f32.xlu0 %v227
    %v229 = vpop.xlane.xlu0 %228
    %v230 = vld [vmem:[#allocation2] sm:$0x1]
    %v232 = vlaneseq
    %v233 = vshrl.u32 %v232, 7
    %v234 = vsub.s32 0, %v233
    %v235 = vrot.slane %v229, %v234
    %v236 = vlaneseq
    %v237 = vshrl.u32 %v236, 7
    %v238 = vsub.s32 1, %v237
    %v239 = vrot.slane %v229, %v238
    %v240 = vlaneseq
    %v241 = vshrl.u32 %v240, 7
    %v242 = vsub.s32 2, %v241
    %v243 = vrot.slane %v229, %v242
    %v244 = vlaneseq
    %v245 = vshrl.u32 %v244, 7
    %v246 = vsub.s32 3, %v245
    %v247 = vrot.slane %v229, %v246
    %v248 = vlaneseq
    %v249 = vshrl.u32 %v248, 7
    %v250 = vsub.s32 4, %v249
    %v251 = vrot.slane %v229, %v250
    %v252 = vlaneseq
    %v253 = vshrl.u32 %v252, 7
    %v254 = vsub.s32 5, %v253
    %v255 = vrot.slane %v229, %v254
    %v256 = vlaneseq
    %v257 = vshrl.u32 %v256, 7
    %v258 = vsub.s32 6, %v257
    %v259 = vrot.slane %v229, %v258
    %v260 = vlaneseq
    %v261 = vshrl.u32 %v260, 7
    %v262 = vsub.s32 7, %v261
    %v263 = vrot.slane %v229, %v262
    %v264 = vcombine.low %v235, %v239
    %v265 = vcombine.low %v243, %v247
    %v266 = vcombine.low %v251, %v255
    %v267 = vcombine.low %v259, %v263
    %v269 = vunpack.c.l.s4 1966171168
    %v270 = vunpack.c.0.s8 %v269
    %v271 = vlaneseq
    %v272 = vshrl.u32 %v271, 7
    %v273 = vsub.s32 %v270, %v272
    %v274 = vrot.slane %v264, %v273
    %v276 = vunpack.c.l.s4 1966171168
    %v277 = vunpack.c.0.s8 %v276
    %v278 = vlaneseq
    %v279 = vshrl.u32 %v278, 7
    %v280 = vsub.s32 %v277, %v279
    %v281 = vrot.slane %v265, %v280
    %v283 = vunpack.c.l.s4 1966171168
    %v284 = vunpack.c.0.s8 %v283
    %v285 = vlaneseq
    %v286 = vshrl.u32 %v285, 7
    %v287 = vsub.s32 %v284, %v286
    %v288 = vrot.slane %v266, %v287
    %v290 = vunpack.c.l.s4 1966171168
    %v291 = vunpack.c.0.s8 %v290
    %v292 = vlaneseq
    %v293 = vshrl.u32 %v292, 7
    %v294 = vsub.s32 %v291, %v293
    %v295 = vrot.slane %v267, %v294
    %v296 = vcombine.low %v274, %v281
    %v297 = vcombine.low %v288, %v295
    %v299 = vunpack.c.l.s4 1966171168
    %v300 = vunpack.c.0.s8 %v299
    %v301 = vlaneseq
    %v302 = vshrl.u32 %v301, 7
    %v303 = vsub.s32 %v300, %v302
    %v304 = vrot.slane %v296, %v303
    %v306 = vunpack.c.l.s4 1966171168
    %v307 = vunpack.c.0.s8 %v306
    %v308 = vlaneseq
    %v309 = vshrl.u32 %v308, 7
    %v310 = vsub.s32 %v307, %v309
    %v311 = vrot.slane %v297, %v310
    %v312 = vcombine.low %v304, %v311
    %313 = vset.pattern.permute.xlu0 0
    %314 = vperm.xlu0 %313, %v312
    %v315 = vpop.permute.xlu0 %314
    %v316 = vlaneseq
    %v317 = vand.u32 %v316, 127
    %v318 = vlaneseq
    %v319 = vshrl.u32 %v318, 7
    %v320 = vsub.s32 %v317, %v319
    %v321 = vrot.slane %v315, %v320
    %v323 = vunpack.c.l.s4 1966171168
    %v324 = vunpack.c.0.s8 %v323
    %v325 = vlaneseq
    %v326 = vshrl.u32 %v325, 7
    %v327 = vsub.s32 %v324, %v326
    %v328 = vrot.slane %v321, %v327
    %v330 = vunpack.c.l.s4 1966171168
    %v331 = vunpack.c.0.s8 %v330
    %v332 = vlaneseq
    %v333 = vshrl.u32 %v332, 7
    %v334 = vsub.s32 %v331, %v333
    %v335 = vrot.slane %v328, %v334
    %v337 = vadd.f32 %v230, %v335
    %vm338 = vcmask 57344
    %339 = vst.msk [vmem:[#allocation2] sm:$0x1] %vm338, %v337
    // Predicated region
    $region50: #{_forward_impl.1} parent=1 // pred_check
      %p340 = pneg %p80
    $region51: #{_forward_impl.1} parent=1 // pred_check_branch
      %342 = sbr.rel (%p340) target = $region53
    $region52: #{_forward_impl.1} parent=1 // pred_region
      %v343 = vld [vmem:[#allocation2] sm:$0x1]
      %344 = vst.msk [vmem:[#allocation12] sm:$0x1] %vm338, %v343
    $region53: #{_forward_impl.1} parent=1 // pred_fallthru
      _
    // Predicated region
    $region54: #{_forward_impl.1} parent=1 // pred_check
      _
    $region55: #{_forward_impl.1} parent=1 // pred_check_branch
      %346 = sbr.rel (0) target = $region57
    $region56: #{_forward_impl.1} parent=1 // pred_region
      %s348 = ssub.s32 16, 16
      %349 = vsyncadd [#allocation6], %s348
      %s351 = sshll.u32 [#allocation12], 4
      %s352 = int_to_ptr.vmem [resolvable:$true] %s351
      %354 = dma.vmem_to_hbm [thread:$0]  %s352, 16, %s7, [#allocation6]
    $region57: #{_forward_impl.1} parent=1 // pred_fallthru
      _
    // Predicated region
    $region58: #{_forward_impl.1} parent=1 // pred_check
      _
    $region59: #{_forward_impl.1} parent=1 // pred_check_branch
      %356 = sbr.rel (0) target = $region61
    $region60: #{_forward_impl.1} parent=1 // pred_region
      %357 = dma.done [#allocation6], 16
    $region61: #{_forward_impl.1} parent=1 // pred_fallthru
      _
    %358 = vsyncpa [#allocation5], 1
    %359 = vsyncpa [#allocation8], 1
    %360 = vsyncpa [#allocation11], 1
    %361 = vsyncpa [#allocation6], 1

// kernel: _forward_impl.1
$region0: #{_forward_impl.1}
  #allocation0 [shape = 'u32[]', space=smem, size = 0x4, offset = 0x4, fixed_abs, tag = 'smem constant byte address 0x4 - core index']
  #allocation1 [shape = 'u32[144,128]{1,0:T(1,128)}', space=vmem, size = 0x12000, scoped, tag = 'internal scratch']
  #allocation2 [shape = 'f32[1,1,8]{2,1,0:T(1,128)}', space=vmem, size = 0x200, scoped, tag = 'scratch operand']
  #allocation3 [shape = 'f32[1]{0:T(128)S(6)}', space=smem, size = 0x200, scoped, tag = 'scoped memory for _forward_impl.1']
  %s0 = inlined_call_operand.hbm [shape: f32[8,32], index: 0, kind: input, shape index: {}]
  %s1 = inlined_call_operand.hbm [shape: f32[8,32], index: 1, kind: input, shape index: {}]
  %s2 = inlined_call_operand.hbm [shape: bf16[32,128], index: 2, kind: input, shape index: {}]
  %s3 = inlined_call_operand.hbm [shape: bf16[32,128], index: 3, kind: input, shape index: {}]
  %s4 = inlined_call_operand.vmem [shape: f32[1,128], index: 4, kind: input, shape index: {}]
  %s5 = inlined_call_operand.vmem [shape: f32[1,128], index: 5, kind: input, shape index: {}]
  %s6 = inlined_call_operand.<no memory space> [shape: f32[1], index: 6, kind: input, shape index: {}]
  %s7 = inlined_call_operand.hbm [shape: f32[1,1,8], index: 7, kind: output, shape index: {}]
  %s8 = sld [smem:[#allocation0]]
  $region62: #{_forward_impl.1} parent=0
    _
  %s10 = ssub.s32 1, %s8
  %s11 = scalar_select 0, %s10, %s8
  %12 = sst [smem:[#allocation3]] %s6
  $region1: #{_forward_impl.1} parent=0
    #allocation4 [shape = 'u8[4096]{0}', space=vmem, size = 0x1000, scoped, tag = 'input window, operand 0, single buffered']
    #allocation5 [shape = 's32[1]{0}', space=sflag, size = 0x4, scoped, tag = 'scoped memory for _forward_impl.1']
    #allocation6 [shape = 's32[1]{0}', space=sflag, size = 0x4, scoped, tag = 'scoped memory for _forward_impl.1']
    #allocation7 [shape = 'u8[4096]{0}', space=vmem, size = 0x1000, scoped, tag = 'input window, operand 1, single buffered']
    #allocation8 [shape = 's32[1]{0}', space=sflag, size = 0x4, scoped, tag = 'scoped memory for _forward_impl.1']
    #allocation9 [shape = 'u8[8192]{0}', space=vmem, size = 0x2000, scoped, tag = 'input window, operand 2, single buffered']
    #allocation10 [shape = 'u8[8192]{0}', space=vmem, size = 0x2000, scoped, tag = 'input window, operand 3, single buffered']
    #allocation11 [shape = 's32[1]{0}', space=sflag, size = 0x4, scoped, tag = 'scoped memory for _forward_impl.1']
    #allocation12 [shape = 'u8[512]{0}', space=vmem, size = 0x400, scoped, tag = 'output window, operand 0, single buffered']
    %13 = vsyncpa [#allocation5], 0
    %14 = vsyncpa [#allocation8], 0
    %15 = vsyncpa [#allocation11], 0
    %16 = vsyncpa [#allocation6], 0
    // Predicated region
    $region2: #{_forward_impl.1} parent=1 // pred_check
      _
    $region3: #{_forward_impl.1} parent=1 // pred_check_branch
      %18 = sbr.rel (0) target = $region5
    $region4: #{_forward_impl.1} parent=1 // pred_region
      %s20 = ssub.s32 128, 128
      %21 = vsyncadd [#allocation5], %s20
      %s23 = sshll.u32 [#allocation4], 4
      %s24 = int_to_ptr.vmem [resolvable:$true] %s23
      %26 = dma.hbm_to_vmem [thread:$0]  %s0, 128, %s24, [#allocation5]
    $region5: #{_forward_impl.1} parent=1 // pred_fallthru
      _
    // Predicated region
    $region6: #{_forward_impl.1} parent=1 // pred_check
      _
    $region7: #{_forward_impl.1} parent=1 // pred_check_branch
      %28 = sbr.rel (0) target = $region9
    $region8: #{_forward_impl.1} parent=1 // pred_region
      %s30 = ssub.s32 128, 128
      %31 = vsyncadd [#allocation8], %s30
      %s33 = sshll.u32 [#allocation7], 4
      %s34 = int_to_ptr.vmem [resolvable:$true] %s33
      %36 = dma.hbm_to_vmem [thread:$0]  %s1, 128, %s34, [#allocation8]
    $region9: #{_forward_impl.1} parent=1 // pred_fallthru
      _
    // Predicated region
    $region10: #{_forward_impl.1} parent=1 // pred_check
      _
    $region11: #{_forward_impl.1} parent=1 // pred_check_branch
      %38 = sbr.rel (0) target = $region13
    $region12: #{_forward_impl.1} parent=1 // pred_region
      %s40 = ssub.s32 256, 256
      %41 = vsyncadd [#allocation8], %s40
      %s42 = sshll.u32 [#allocation9], 4
      %s43 = int_to_ptr.vmem [resolvable:$true] %s42
      %48 = dma.hbm_to_vmem [thread:$0]  %s2, 256, %s43, [#allocation8], 64, 64, 4
    $region13: #{_forward_impl.1} parent=1 // pred_fallthru
      _
    // Predicated region
    $region14: #{_forward_impl.1} parent=1 // pred_check
      _
    $region15: #{_forward_impl.1} parent=1 // pred_check_branch
      %50 = sbr.rel (0) target = $region17
    $region16: #{_forward_impl.1} parent=1 // pred_region
      %s52 = ssub.s32 256, 256
      %53 = vsyncadd [#allocation11], %s52
      %s54 = sshll.u32 [#allocation10], 4
      %s55 = int_to_ptr.vmem [resolvable:$true] %s54
      %60 = dma.hbm_to_vmem [thread:$0]  %s3, 256, %s55, [#allocation11], 64, 64, 4
    $region17: #{_forward_impl.1} parent=1 // pred_fallthru
      _
    // Predicated region
    $region18: #{_forward_impl.1} parent=1 // pred_check
      _
    $region19: #{_forward_impl.1} parent=1 // pred_check_branch
      %62 = sbr.rel (0) target = $region21
    $region20: #{_forward_impl.1} parent=1 // pred_region
      _
    $region21: #{_forward_impl.1} parent=1 // pred_fallthru
      _
    // Predicated region
    $region22: #{_forward_impl.1} parent=1 // pred_check
      _
    $region23: #{_forward_impl.1} parent=1 // pred_check_branch
      %64 = sbr.rel (0) target = $region25
    $region24: #{_forward_impl.1} parent=1 // pred_region
      _
    $region25: #{_forward_impl.1} parent=1 // pred_fallthru
      _
    // Predicated region
    $region26: #{_forward_impl.1} parent=1 // pred_check
      _
    $region27: #{_forward_impl.1} parent=1 // pred_check_branch
      %66 = sbr.rel (0) target = $region29
    $region28: #{_forward_impl.1} parent=1 // pred_region
      _
    $region29: #{_forward_impl.1} parent=1 // pred_fallthru
      _
    // Predicated region
    $region30: #{_forward_impl.1} parent=1 // pred_check
      _
    $region31: #{_forward_impl.1} parent=1 // pred_check_branch
      %68 = sbr.rel (0) target = $region33
    $region32: #{_forward_impl.1} parent=1 // pred_region
      %69 = dma.done [#allocation5], 128
    $region33: #{_forward_impl.1} parent=1 // pred_fallthru
      _
    // Predicated region
    $region34: #{_forward_impl.1} parent=1 // pred_check
      _
    $region35: #{_forward_impl.1} parent=1 // pred_check_branch
      %71 = sbr.rel (0) target = $region37
    $region36: #{_forward_impl.1} parent=1 // pred_region
      %72 = dma.done [#allocation8], 128
    $region37: #{_forward_impl.1} parent=1 // pred_fallthru
      _
    // Predicated region
    $region38: #{_forward_impl.1} parent=1 // pred_check
      _
    $region39: #{_forward_impl.1} parent=1 // pred_check_branch
      %74 = sbr.rel (0) target = $region41
    $region40: #{_forward_impl.1} parent=1 // pred_region
      %75 = dma.done [#allocation8], 256
    $region41: #{_forward_impl.1} parent=1 // pred_fallthru
      _
    // Predicated region
    $region42: #{_forward_impl.1} parent=1 // pred_check
      _
    $region43: #{_forward_impl.1} parent=1 // pred_check_branch
      %77 = sbr.rel (0) target = $region45
    $region44: #{_forward_impl.1} parent=1 // pred_region
      %78 = dma.done [#allocation11], 256
    $region45: #{_forward_impl.1} parent=1 // pred_fallthru
      _
    %p80 = scmp.eq.s32.totalorder 0, 0
    // Predicated region
    $region46: #{_forward_impl.1} parent=1 // pred_check
      %p81 = pneg %p80
    $region47: #{_forward_impl.1} parent=1 // pred_check_branch
      %83 = sbr.rel (%p81) target = $region49
    $region48: #{_forward_impl.1} parent=1 // pred_region
      %s84 = sld [smem:[#allocation3]]
      %v85 = vstv %s84
      %vm86 = vcmask 57344
      %87 = vst.msk [vmem:[#allocation2] sm:$0x1] %vm86, %v85
    $region49: #{_forward_impl.1} parent=1 // pred_fallthru
      _
    %v88 = vld [vmem:[#allocation4] sm:$0xff]
    %v89 = vpack.c.bf16 %v88, %v88
    %v90 = vld [vmem:[#allocation7] sm:$0xff]
    %v91 = vpack.c.bf16 %v90, %v90
    %v92 = vld [vmem:[#allocation9] sm:$0xf]
    %v93 = vld [vmem:[#allocation9 + $0x4] sm:$0xf]
    %v94 = vld [vmem:[#allocation9 + $0x8] sm:$0xf]
    %v95 = vld [vmem:[#allocation9 + $0xc] sm:$0xf]
    %v96 = vld [vmem:[#allocation10] sm:$0xf]
    %v97 = vld [vmem:[#allocation10 + $0x4] sm:$0xf]
    %v98 = vld [vmem:[#allocation10 + $0x8] sm:$0xf]
    %v99 = vld [vmem:[#allocation10 + $0xc] sm:$0xf]
    %v104 = vunpack.c.l.b16 %v96
    %v105 = vunpack.c.l.b16 %v97
    %v106 = vunpack.c.l.b16 %v98
    %v107 = vunpack.c.l.b16 %v99
    %v108 = vpack.c.b16 %v105, %v104
    %v109 = vpack.c.b16 %v107, %v106
    %vm112 = vcmask 261120
    %v114 = vsel %vm112, %v91, 0
    %116 = vmatprep.subr.bf16.mxu0 0
    %117 = vmatpush1.bf16.msra.mxu0 %v108
    %118 = vmatprep.subr.bf16.mxu0 0
    %119 = vmatpush1.bf16.msra.mxu0 %v109
    %120 = vmatprep.subr.bf16.mxu0 0
    %121 = vmatpush1.bf16.msra.mxu0 0
    %122 = vmatprep.subr.bf16.mxu0 0
    %123 = vmatpush1.bf16.msra.mxu0 0
    %124 = vmatprep.subr.bf16.mxu0 0
    %125 = vmatpush1.bf16.msra.mxu0 0
    %126 = vmatprep.subr.bf16.mxu0 0
    %127 = vmatpush1.bf16.msra.mxu0 0
    %128 = vmatprep.subr.bf16.mxu0 0
    %129 = vmatpush1.bf16.msra.mxu0 0
    %130 = vmatprep.subr.bf16.mxu0 0
    %131 = vmatpush1.bf16.msra.mxu0 0
    %132 = vmatprep.subr.bf16.mxu0 0
    %133 = vmatpush1.bf16.msra.mxu0 0
    %134 = vmatprep.subr.bf16.mxu0 0
    %135 = vmatpush1.bf16.msra.mxu0 0
    %136 = vmatprep.subr.bf16.mxu0 0
    %137 = vmatpush1.bf16.msra.mxu0 0
    %138 = vmatprep.subr.bf16.mxu0 0
    %139 = vmatpush1.bf16.msra.mxu0 0
    %140 = vmatprep.subr.bf16.mxu0 0
    %141 = vmatpush1.bf16.msra.mxu0 0
    %142 = vmatprep.subr.bf16.mxu0 0
    %143 = vmatpush1.bf16.msra.mxu0 0
    %144 = vmatprep.subr.bf16.mxu0 0
    %145 = vmatpush1.bf16.msra.mxu0 0
    %146 = vmatprep.subr.bf16.mxu0 0
    %147 = vmatpush1.bf16.msra.mxu0 0
    %148 = vmatprep.mubr.bf16.mxu0 0
    %149 = vmatmul.mubr.bf16.gmra.mrb[0].mxu0 %v114
    %v150 = vpop.f32.mrb[0].mxu0
    %v151 = vadd.f32 0.0, %v150
    %v152 = vpop.f32.mrb[0].mxu0
    %v153 = vpop.f32.mrb[0].mxu0
    %v154 = vpop.f32.mrb[0].mxu0
    %155 = vdwg.mxu0
    %v160 = vunpack.c.l.b16 %v92
    %v161 = vunpack.c.l.b16 %v93
    %v162 = vunpack.c.l.b16 %v94
    %v163 = vunpack.c.l.b16 %v95
    %v164 = vpack.c.b16 %v161, %v160
    %v165 = vpack.c.b16 %v163, %v162
    %v169 = vsel %vm112, %v89, 0
    %171 = vmatprep.subr.bf16.mxu0 0
    %172 = vmatpush1.bf16.msra.mxu0 %v164
    %173 = vmatprep.subr.bf16.mxu0 0
    %174 = vmatpush1.bf16.msra.mxu0 %v165
    %175 = vmatprep.subr.bf16.mxu0 0
    %176 = vmatpush1.bf16.msra.mxu0 0
    %177 = vmatprep.subr.bf16.mxu0 0
    %178 = vmatpush1.bf16.msra.mxu0 0
    %179 = vmatprep.subr.bf16.mxu0 0
    %180 = vmatpush1.bf16.msra.mxu0 0
    %181 = vmatprep.subr.bf16.mxu0 0
    %182 = vmatpush1.bf16.msra.mxu0 0
    %183 = vmatprep.subr.bf16.mxu0 0
    %184 = vmatpush1.bf16.msra.mxu0 0
    %185 = vmatprep.subr.bf16.mxu0 0
    %186 = vmatpush1.bf16.msra.mxu0 0
    %187 = vmatprep.subr.bf16.mxu0 0
    %188 = vmatpush1.bf16.msra.mxu0 0
    %189 = vmatprep.subr.bf16.mxu0 0
    %190 = vmatpush1.bf16.msra.mxu0 0
    %191 = vmatprep.subr.bf16.mxu0 0
    %192 = vmatpush1.bf16.msra.mxu0 0
    %193 = vmatprep.subr.bf16.mxu0 0
    %194 = vmatpush1.bf16.msra.mxu0 0
    %195 = vmatprep.subr.bf16.mxu0 0
    %196 = vmatpush1.bf16.msra.mxu0 0
    %197 = vmatprep.subr.bf16.mxu0 0
    %198 = vmatpush1.bf16.msra.mxu0 0
    %199 = vmatprep.subr.bf16.mxu0 0
    %200 = vmatpush1.bf16.msra.mxu0 0
    %201 = vmatprep.subr.bf16.mxu0 0
    %202 = vmatpush1.bf16.msra.mxu0 0
    %203 = vmatprep.mubr.bf16.mxu0 0
    %204 = vmatmul.mubr.bf16.gmra.mrb[0].mxu0 %v169
    %v205 = vpop.f32.mrb[0].mxu0
    %v206 = vadd.f32 %v151, %v205
    %v207 = vpop.f32.mrb[0].mxu0
    %v208 = vpop.f32.mrb[0].mxu0
    %v209 = vpop.f32.mrb[0].mxu0
    %210 = vdwg.mxu0
    %v211 = vld [vmem:[%s4] sm:$0x1]
    %v213 = vlaneseq
    %v214 = vshrl.u32 %v213, 7
    %v215 = vsub.s32 0, %v214
    %v216 = vrot.slane %v211, %v215
    %v218 = vadd.f32 %v206, %v216
    %v219 = vmax.f32 %v218, 0.0
    %v220 = vld [vmem:[%s5] sm:$0x1]
    %v222 = vlaneseq
    %v223 = vshrl.u32 %v222, 7
    %v224 = vsub.s32 0, %v223
    %v225 = vrot.slane %v220, %v224
    %v227 = vmul.f32 %v219, %v225
    %228 = vadd.xlane.f32.xlu0 %v227
    %v229 = vpop.xlane.xlu0 %228
    %v230 = vld [vmem:[#allocation2] sm:$0x1]
    %v232 = vlaneseq
    %v233 = vshrl.u32 %v232, 7
    %v234 = vsub.s32 0, %v233
    %v235 = vrot.slane %v229, %v234
    %v236 = vlaneseq
    %v237 = vshrl.u32 %v236, 7
    %v238 = vsub.s32 1, %v237
    %v239 = vrot.slane %v229, %v238
    %v240 = vlaneseq
    %v241 = vshrl.u32 %v240, 7
    %v242 = vsub.s32 2, %v241
    %v243 = vrot.slane %v229, %v242
    %v244 = vlaneseq
    %v245 = vshrl.u32 %v244, 7
    %v246 = vsub.s32 3, %v245
    %v247 = vrot.slane %v229, %v246
    %v248 = vlaneseq
    %v249 = vshrl.u32 %v248, 7
    %v250 = vsub.s32 4, %v249
    %v251 = vrot.slane %v229, %v250
    %v252 = vlaneseq
    %v253 = vshrl.u32 %v252, 7
    %v254 = vsub.s32 5, %v253
    %v255 = vrot.slane %v229, %v254
    %v256 = vlaneseq
    %v257 = vshrl.u32 %v256, 7
    %v258 = vsub.s32 6, %v257
    %v259 = vrot.slane %v229, %v258
    %v260 = vlaneseq
    %v261 = vshrl.u32 %v260, 7
    %v262 = vsub.s32 7, %v261
    %v263 = vrot.slane %v229, %v262
    %v264 = vcombine.low %v235, %v239
    %v265 = vcombine.low %v243, %v247
    %v266 = vcombine.low %v251, %v255
    %v267 = vcombine.low %v259, %v263
    %v269 = vunpack.c.l.s4 1966171168
    %v270 = vunpack.c.0.s8 %v269
    %v271 = vlaneseq
    %v272 = vshrl.u32 %v271, 7
    %v273 = vsub.s32 %v270, %v272
    %v274 = vrot.slane %v264, %v273
    %v276 = vunpack.c.l.s4 1966171168
    %v277 = vunpack.c.0.s8 %v276
    %v278 = vlaneseq
    %v279 = vshrl.u32 %v278, 7
    %v280 = vsub.s32 %v277, %v279
    %v281 = vrot.slane %v265, %v280
    %v283 = vunpack.c.l.s4 1966171168
    %v284 = vunpack.c.0.s8 %v283
    %v285 = vlaneseq
    %v286 = vshrl.u32 %v285, 7
    %v287 = vsub.s32 %v284, %v286
    %v288 = vrot.slane %v266, %v287
    %v290 = vunpack.c.l.s4 1966171168
    %v291 = vunpack.c.0.s8 %v290
    %v292 = vlaneseq
    %v293 = vshrl.u32 %v292, 7
    %v294 = vsub.s32 %v291, %v293
    %v295 = vrot.slane %v267, %v294
    %v296 = vcombine.low %v274, %v281
    %v297 = vcombine.low %v288, %v295
    %v299 = vunpack.c.l.s4 1966171168
    %v300 = vunpack.c.0.s8 %v299
    %v301 = vlaneseq
    %v302 = vshrl.u32 %v301, 7
    %v303 = vsub.s32 %v300, %v302
    %v304 = vrot.slane %v296, %v303
    %v306 = vunpack.c.l.s4 1966171168
    %v307 = vunpack.c.0.s8 %v306
    %v308 = vlaneseq
    %v309 = vshrl.u32 %v308, 7
    %v310 = vsub.s32 %v307, %v309
    %v311 = vrot.slane %v297, %v310
    %v312 = vcombine.low %v304, %v311
    %313 = vset.pattern.permute.xlu0 0
    %314 = vperm.xlu0 %313, %v312
    %v315 = vpop.permute.xlu0 %314
    %v316 = vlaneseq
    %v317 = vand.u32 %v316, 127
    %v318 = vlaneseq
    %v319 = vshrl.u32 %v318, 7
    %v320 = vsub.s32 %v317, %v319
    %v321 = vrot.slane %v315, %v320
    %v323 = vunpack.c.l.s4 1966171168
    %v324 = vunpack.c.0.s8 %v323
    %v325 = vlaneseq
    %v326 = vshrl.u32 %v325, 7
    %v327 = vsub.s32 %v324, %v326
    %v328 = vrot.slane %v321, %v327
    %v330 = vunpack.c.l.s4 1966171168
    %v331 = vunpack.c.0.s8 %v330
    %v332 = vlaneseq
    %v333 = vshrl.u32 %v332, 7
    %v334 = vsub.s32 %v331, %v333
    %v335 = vrot.slane %v328, %v334
    %v337 = vadd.f32 %v230, %v335
    %vm338 = vcmask 57344
    %339 = vst.msk [vmem:[#allocation2] sm:$0x1] %vm338, %v337
    // Predicated region
    $region50: #{_forward_impl.1} parent=1 // pred_check
      %p340 = pneg %p80
    $region51: #{_forward_impl.1} parent=1 // pred_check_branch
      %342 = sbr.rel (%p340) target = $region53
    $region52: #{_forward_impl.1} parent=1 // pred_region
      %v343 = vld [vmem:[#allocation2] sm:$0x1]
      %344 = vst.msk [vmem:[#allocation12] sm:$0x1] %vm338, %v343
    $region53: #{_forward_impl.1} parent=1 // pred_fallthru
      _
    // Predicated region
    $region54: #{_forward_impl.1} parent=1 // pred_check
      _
    $region55: #{_forward_impl.1} parent=1 // pred_check_branch
      %346 = sbr.rel (0) target = $region57
    $region56: #{_forward_impl.1} parent=1 // pred_region
      %s348 = ssub.s32 16, 16
      %349 = vsyncadd [#allocation6], %s348
      %s351 = sshll.u32 [#allocation12], 4
      %s352 = int_to_ptr.vmem [resolvable:$true] %s351
      %354 = dma.vmem_to_hbm [thread:$0]  %s352, 16, %s7, [#allocation6]
    $region57: #{_forward_impl.1} parent=1 // pred_fallthru
      _
    // Predicated region
    $region58: #{_forward_impl.1} parent=1 // pred_check
      _
    $region59: #{_forward_impl.1} parent=1 // pred_check_branch
      %356 = sbr.rel (0) target = $region61
    $region60: #{_forward_impl.1} parent=1 // pred_region
      %357 = dma.done [#allocation6], 16
    $region61: #{_forward_impl.1} parent=1 // pred_fallthru
      _
    %358 = vsyncpa [#allocation5], 1
    %359 = vsyncpa [#allocation8], 1
    %360 = vsyncpa [#allocation11], 1
    %361 = vsyncpa [#allocation6], 1

</llo_original>
